<compile_context>
chip_gen: v5e
topology: v5e:2x2
jax: 0.10.0
libtpu: 0.0.40
codegen_flags: <defaults>
</compile_context>

<pallas_src>
import jax
import jax.numpy as jnp
from jax.experimental import pallas as pl
from jax.experimental.pallas import tpu as pltpu


def _round_up(a: int, b: int) -> int:
    return (a + b - 1) // b * b


def dhead_kernel(x_ref, w_ref, b_ref, o_ref):
    # x_ref: (TM, S, 128) bf16   activations for this batch tile
    # w_ref: (S, 128)     bf16   lane-dense flattened conv weight (resident)
    # b_ref: (1,)         f32    bias, in SMEM
    # o_ref: (TM, 1)      f32    sigmoid output for this batch tile
    x = x_ref[...].astype(jnp.float32)
    w = w_ref[...].astype(jnp.float32)
    prod = x * w[None, :, :]                      # VPU, f32
    z = jnp.sum(prod, axis=2)                     # (TM, S): lane reduce (XLU)
    z = jnp.sum(z, axis=1, keepdims=True)         # (TM, 1)
    z = z + b_ref[0]
    # sigmoid(z) = 0.5 * (tanh(z/2) + 1): numerically stable, single EUP op.
    o_ref[...] = (0.5 * (jnp.tanh(0.5 * z) + 1.0)).astype(o_ref.dtype)


def dhead_forward(x, weight, bias, *, compute_dtype=jnp.bfloat16, tm_max=512):
    """x: (N, 256, 4, 4) NCHW; weight: (1, 256, 4, 4); bias: (1,) -> (N, 1, 1, 1) f32."""
    N, C, H, W = x.shape
    OC, IC, KH, KW = weight.shape
    assert C == IC == 256 and OC == 1 and KH == KW == 4
    # Valid conv with a 4x4 kernel on a 4x4 input -> 1x1 output (InfoGAN DHead case).
    # TODO(synk): a true sliding conv (H, W > 4) is not implemented; DHead always sees 4x4.
    assert H == KH and W == KW, "DHead expects 4x4 spatial input"

    K = C * H * W                      # 4096-wide contraction
    LANES = 128
    assert K % LANES == 0
    S = K // LANES                     # 32 sublane rows of the lane-dense layout

    # Lane-dense layouts; row-major (C, H, W) flatten == PyTorch receptive-field order.
    x_r = x.reshape(N, S, LANES).astype(compute_dtype)
    w_r = weight.reshape(S, LANES).astype(compute_dtype)
    b_r = bias.reshape(1).astype(jnp.float32)

    # Batch tile: multiple of 8 sublanes, capped so double-buffered bf16 x tiles
    # stay well inside the scoped-VMEM default on all generations.
    TM = min(tm_max, _round_up(max(N, 1), 8))
    N_pad = _round_up(N, TM)
    if N_pad != N:
        x_r = jnp.pad(x_r, ((0, N_pad - N), (0, 0), (0, 0)))

    itemsize = jnp.dtype(compute_dtype).itemsize
    cost = pl.CostEstimate(
        flops=2 * N_pad * K,
        transcendentals=N_pad,
        bytes_accessed=N_pad * K * itemsize + K * itemsize + N_pad * 4,
    )

    out = pl.pallas_call(
        dhead_kernel,
        out_shape=jax.ShapeDtypeStruct((N_pad, 1), jnp.float32),
        grid=(N_pad // TM,),
        in_specs=[
            pl.BlockSpec((TM, S, LANES), lambda i: (i, 0, 0)),   # x: tiled over batch
            pl.BlockSpec((S, LANES), lambda i: (0, 0)),          # weight: stays resident
            pl.BlockSpec(memory_space=pltpu.MemorySpace.SMEM),   # bias: scalar in SMEM
        ],
        out_specs=pl.BlockSpec((TM, 1), lambda i: (i, 0)),
        compiler_params=pltpu.CompilerParams(
            dimension_semantics=("parallel",),                   # megacore split on v7x
        ),
        cost_estimate=cost,
    )(x_r, w_r, b_r)

    return out[:N].reshape(N, 1, 1, 1)


if __name__ == "__main__":
    key = jax.random.PRNGKey(0)
    kx, kw, kb = jax.random.split(key, 3)

    N, C, H, W = 2, 256, 4, 4
    x = jax.random.normal(kx, (N, C, H, W), dtype=jnp.float32)

    # Deterministic parameter init (mimics PyTorch Conv2d uniform bound 1/sqrt(fan_in)).
    fan_in = C * 4 * 4
    bound = 1.0 / (fan_in ** 0.5)
    weight = jax.random.uniform(kw, (1, C, 4, 4), minval=-bound, maxval=bound,
                                dtype=jnp.float32)
    bias = jax.random.uniform(kb, (1,), minval=-bound, maxval=bound,
                              dtype=jnp.float32)

    out = dhead_forward(x, weight, bias)
    out = jax.block_until_ready(out)
    assert out.shape == (N, 1, 1, 1)

    # Reference 1 (tight): same bf16-cast inputs, f32 math — checks the kernel math.
    xb = x.astype(jnp.bfloat16).astype(jnp.float32)
    wb = weight.astype(jnp.bfloat16).astype(jnp.float32)
    ref_b = jax.nn.sigmoid(
        jnp.einsum("nchw,ochw->no", xb, wb) + bias
    ).reshape(N, 1, 1, 1)
    assert jnp.allclose(out, ref_b, atol=1e-4, rtol=1e-4)

    # Reference 2 (loose): full-f32 conv+sigmoid semantics of the PyTorch module.
    ref_f = jax.nn.sigmoid(
        jnp.einsum("nchw,ochw->no", x, weight) + bias
    ).reshape(N, 1, 1, 1)
    assert jnp.allclose(out, ref_f, atol=1e-2, rtol=1e-2)

    print("KERNEL_OK")
</pallas_src>

<mosaic_0001>
module attributes {stable_mosaic.version = 11 : i64} {
  func.func @dhead_kernel(%arg0: i32, %arg1: memref<8x32x128xbf16, #tpu.memory_space<vmem>>, %arg2: memref<32x128xbf16, #tpu.memory_space<vmem>>, %arg3: memref<1xf32, #tpu.memory_space<smem>>, %arg4: memref<8x1xf32, #tpu.memory_space<vmem>>) attributes {dimension_semantics = [#tpu.dimension_semantics<parallel>], iteration_bounds = array<i64: 1>, scalar_prefetch = 0 : i64, scratch_operands = 0 : i64, tpu.core_type = #tpu.core_type<tc>, window_params = [{transform_indices = @transform_0, window_bounds = array<i64: 8, 32, 128>}, {pipeline_mode = #tpu.pipeline_mode<synchronous>, transform_indices = @transform_1, window_bounds = array<i64: 32, 128>}, {transform_indices = @transform_2, window_bounds = array<i64: 1>}, {transform_indices = @transform_3, window_bounds = array<i64: 8, 1>}]} {
    %c0 = arith.constant 0 : index
    %c0_0 = arith.constant 0 : index
    %c0_1 = arith.constant 0 : index
    %0 = vector.load %arg1[%c0, %c0_0, %c0_1] : memref<8x32x128xbf16, #tpu.memory_space<vmem>>, vector<8x32x128xbf16>
    %1 = arith.extf %0 : vector<8x32x128xbf16> to vector<8x32x128xf32>
    %c0_2 = arith.constant 0 : index
    %c0_3 = arith.constant 0 : index
    %2 = vector.load %arg2[%c0_2, %c0_3] : memref<32x128xbf16, #tpu.memory_space<vmem>>, vector<32x128xbf16>
    %3 = arith.extf %2 : vector<32x128xbf16> to vector<32x128xf32>
    %4 = vector.shape_cast %3 : vector<32x128xf32> to vector<1x32x128xf32>
    %5 = vector.broadcast %4 : vector<1x32x128xf32> to vector<8x32x128xf32>
    %6 = arith.mulf %1, %5 : vector<8x32x128xf32>
    %cst = arith.constant dense<0.000000e+00> : vector<8x32xf32>
    %7 = vector.multi_reduction <add>, %6, %cst [2] : vector<8x32x128xf32> to vector<8x32xf32>
    %cst_4 = arith.constant dense<0.000000e+00> : vector<8xf32>
    %8 = vector.multi_reduction <add>, %7, %cst_4 [1] : vector<8x32xf32> to vector<8xf32>
    %9 = vector.shape_cast %8 : vector<8xf32> to vector<8x1xf32>
    %c0_5 = arith.constant 0 : index
    %10 = memref.load %arg3[%c0_5] : memref<1xf32, #tpu.memory_space<smem>>
    %11 = vector.broadcast %10 : f32 to vector<8x1xf32>
    %12 = arith.addf %9, %11 : vector<8x1xf32>
    %cst_6 = arith.constant 5.000000e-01 : f32
    %13 = vector.broadcast %cst_6 : f32 to vector<8x1xf32>
    %14 = arith.mulf %13, %12 : vector<8x1xf32>
    %15 = math.tanh %14 : vector<8x1xf32>
    %cst_7 = arith.constant 1.000000e+00 : f32
    %16 = vector.broadcast %cst_7 : f32 to vector<8x1xf32>
    %17 = arith.addf %15, %16 : vector<8x1xf32>
    %cst_8 = arith.constant 5.000000e-01 : f32
    %18 = vector.broadcast %cst_8 : f32 to vector<8x1xf32>
    %19 = arith.mulf %18, %17 : vector<8x1xf32>
    %c0_9 = arith.constant 0 : index
    %c0_10 = arith.constant 0 : index
    %20 = vector.load %arg4[%c0_9, %c0_10] : memref<8x1xf32, #tpu.memory_space<vmem>>, vector<8x1xf32>
    tpu.vector_store %arg4[%c0_9, %c0_10], %19 {strides = array<i32>} : memref<8x1xf32, #tpu.memory_space<vmem>>, vector<8x1xf32>,
    return
  }
  func.func @transform_0(%arg0: i32) -> (i32, i32, i32) {
    %c0_i32 = arith.constant 0 : i32
    %c0_i32_0 = arith.constant 0 : i32
    %c0_i32_1 = arith.constant 0 : i32
    return %arg0, %c0_i32, %c0_i32_0 : i32, i32, i32
  }
  func.func @transform_1(%arg0: i32) -> (i32, i32) {
    %c0_i32 = arith.constant 0 : i32
    %c0_i32_0 = arith.constant 0 : i32
    %c0_i32_1 = arith.constant 0 : i32
    return %c0_i32, %c0_i32_0 : i32, i32
  }
  func.func @transform_2(%arg0: i32) -> i32 {
    %c0_i32 = arith.constant 0 : i32
    %c0_i32_0 = arith.constant 0 : i32
    return %c0_i32 : i32
  }
  func.func @transform_3(%arg0: i32) -> (i32, i32) {
    %c0_i32 = arith.constant 0 : i32
    %c0_i32_0 = arith.constant 0 : i32
    return %arg0, %c0_i32 : i32, i32
  }
}

</mosaic_0001>

<llo_original>
// kernel: tpu_custom_call.1
$region0: #{tpu_custom_call.1}
  #allocation0 [shape = 'u32[]', space=smem, size = 0x4, offset = 0x4, fixed_abs, tag = 'smem constant byte address 0x4 - core index']
  #allocation1 [shape = 'u32[72,128]{1,0:T(1,128)}', space=vmem, size = 0x9000, scoped, tag = 'internal scratch']
  #allocation2 [shape = 'f32[1]{0:T(128)S(6)}', space=smem, size = 0x200, scoped, tag = 'scoped memory for tpu_custom_call.1']
  %s0 = inlined_call_operand.hbm [shape: bf16[8,32,128], index: 0, kind: input, shape index: {}]
  %s1 = inlined_call_operand.hbm [shape: bf16[32,128], index: 1, kind: input, shape index: {}]
  %s2 = inlined_call_operand.<no memory space> [shape: f32[1], index: 2, kind: input, shape index: {}]
  %s3 = inlined_call_operand.vmem [shape: f32[8,1], index: 3, kind: output, shape index: {}]
  %s4 = sld [smem:[#allocation0]]
  $region30: #{tpu_custom_call.1} parent=0
    _
  %s6 = ssub.s32 1, %s4
  %s7 = scalar_select 0, %s6, %s4
  %8 = sst [smem:[#allocation2]] %s2
  $region1: #{tpu_custom_call.1} parent=0
    #allocation3 [shape = 'u8[65536]{0}', space=vmem, size = 0x10000, scoped, tag = 'input window, operand 0, single buffered']
    #allocation4 [shape = 's32[1]{0}', space=sflag, size = 0x4, scoped, tag = 'scoped memory for tpu_custom_call.1']
    #allocation5 [shape = 'u8[8192]{0}', space=vmem, size = 0x2000, scoped, tag = 'input window, operand 1, single buffered']
    #allocation6 [shape = 's32[1]{0}', space=sflag, size = 0x4, scoped, tag = 'scoped memory for tpu_custom_call.1']
    %9 = vsyncpa [#allocation4], 0
    %10 = vsyncpa [#allocation6], 0
    // Predicated region
    $region2: #{tpu_custom_call.1} parent=1 // pred_check
      _
    $region3: #{tpu_custom_call.1} parent=1 // pred_check_branch
      %12 = sbr.rel (0) target = $region5
    $region4: #{tpu_custom_call.1} parent=1 // pred_region
      %14 = vsyncadd [#allocation4], 0
      %s15 = sshll.u32 %s0, 4
      %s16 = int_to_ptr.hbm [resolvable:$true] %s15
      %s17 = sshll.u32 [#allocation3], 4
      %s18 = int_to_ptr.vmem [resolvable:$true] %s17
      %23 = dma.hbm_to_vmem [thread:$0]  %s16, 2048, %s18, [#allocation4], 64, 64, 4
    $region5: #{tpu_custom_call.1} parent=1 // pred_fallthru
      _
    // Predicated region
    $region6: #{tpu_custom_call.1} parent=1 // pred_check
      _
    $region7: #{tpu_custom_call.1} parent=1 // pred_check_branch
      %25 = sbr.rel (0) target = $region9
    $region8: #{tpu_custom_call.1} parent=1 // pred_region
      %27 = vsyncadd [#allocation6], 0
      %s28 = sshll.u32 %s1, 4
      %s29 = int_to_ptr.hbm [resolvable:$true] %s28
      %s30 = sshll.u32 [#allocation5], 4
      %s31 = int_to_ptr.vmem [resolvable:$true] %s30
      %36 = dma.hbm_to_vmem [thread:$0]  %s29, 256, %s31, [#allocation6], 64, 64, 4
    $region9: #{tpu_custom_call.1} parent=1 // pred_fallthru
      _
    // Predicated region
    $region10: #{tpu_custom_call.1} parent=1 // pred_check
      _
    $region11: #{tpu_custom_call.1} parent=1 // pred_check_branch
      %38 = sbr.rel (0) target = $region13
    $region12: #{tpu_custom_call.1} parent=1 // pred_region
      _
    $region13: #{tpu_custom_call.1} parent=1 // pred_fallthru
      _
    // Predicated region
    $region14: #{tpu_custom_call.1} parent=1 // pred_check
      _
    $region15: #{tpu_custom_call.1} parent=1 // pred_check_branch
      %40 = sbr.rel (0) target = $region17
    $region16: #{tpu_custom_call.1} parent=1 // pred_region
      %42 = dma.done [#allocation4], 2048
    $region17: #{tpu_custom_call.1} parent=1 // pred_fallthru
      _
    // Predicated region
    $region18: #{tpu_custom_call.1} parent=1 // pred_check
      _
    $region19: #{tpu_custom_call.1} parent=1 // pred_check_branch
      %44 = sbr.rel (0) target = $region21
    $region20: #{tpu_custom_call.1} parent=1 // pred_region
      %46 = dma.done [#allocation6], 256
    $region21: #{tpu_custom_call.1} parent=1 // pred_fallthru
      _
    %v47 = vld [vmem:[#allocation3] sm:$0xf]
    %v48 = vld [vmem:[#allocation3 + $0x4] sm:$0xf]
    %v49 = vld [vmem:[#allocation3 + $0x8] sm:$0xf]
    %v50 = vld [vmem:[#allocation3 + $0xc] sm:$0xf]
    %v51 = vld [vmem:[#allocation3 + $0x10] sm:$0xf]
    %v52 = vld [vmem:[#allocation3 + $0x14] sm:$0xf]
    %v53 = vld [vmem:[#allocation3 + $0x18] sm:$0xf]
    %v54 = vld [vmem:[#allocation3 + $0x1c] sm:$0xf]
    %v55 = vld [vmem:[#allocation3 + $0x20] sm:$0xf]
    %v56 = vld [vmem:[#allocation3 + $0x24] sm:$0xf]
    %v57 = vld [vmem:[#allocation3 + $0x28] sm:$0xf]
    %v58 = vld [vmem:[#allocation3 + $0x2c] sm:$0xf]
    %v59 = vld [vmem:[#allocation3 + $0x30] sm:$0xf]
    %v60 = vld [vmem:[#allocation3 + $0x34] sm:$0xf]
    %v61 = vld [vmem:[#allocation3 + $0x38] sm:$0xf]
    %v62 = vld [vmem:[#allocation3 + $0x3c] sm:$0xf]
    %v63 = vld [vmem:[#allocation3 + $0x40] sm:$0xf]
    %v64 = vld [vmem:[#allocation3 + $0x44] sm:$0xf]
    %v65 = vld [vmem:[#allocation3 + $0x48] sm:$0xf]
    %v66 = vld [vmem:[#allocation3 + $0x4c] sm:$0xf]
    %v67 = vld [vmem:[#allocation3 + $0x50] sm:$0xf]
    %v68 = vld [vmem:[#allocation3 + $0x54] sm:$0xf]
    %v69 = vld [vmem:[#allocation3 + $0x58] sm:$0xf]
    %v70 = vld [vmem:[#allocation3 + $0x5c] sm:$0xf]
    %v71 = vld [vmem:[#allocation3 + $0x60] sm:$0xf]
    %v72 = vld [vmem:[#allocation3 + $0x64] sm:$0xf]
    %v73 = vld [vmem:[#allocation3 + $0x68] sm:$0xf]
    %v74 = vld [vmem:[#allocation3 + $0x6c] sm:$0xf]
    %v75 = vld [vmem:[#allocation3 + $0x70] sm:$0xf]
    %v76 = vld [vmem:[#allocation3 + $0x74] sm:$0xf]
    %v77 = vld [vmem:[#allocation3 + $0x78] sm:$0xf]
    %v78 = vld [vmem:[#allocation3 + $0x7c] sm:$0xf]
    %v79 = vunpack.c.l.bf16 %v47
    %v80 = vunpack.c.l.bf16 %v48
    %v81 = vunpack.c.l.bf16 %v49
    %v82 = vunpack.c.l.bf16 %v50
    %v83 = vunpack.c.l.bf16 %v51
    %v84 = vunpack.c.l.bf16 %v52
    %v85 = vunpack.c.l.bf16 %v53
    %v86 = vunpack.c.l.bf16 %v54
    %v87 = vunpack.c.l.bf16 %v55
    %v88 = vunpack.c.l.bf16 %v56
    %v89 = vunpack.c.l.bf16 %v57
    %v90 = vunpack.c.l.bf16 %v58
    %v91 = vunpack.c.l.bf16 %v59
    %v92 = vunpack.c.l.bf16 %v60
    %v93 = vunpack.c.l.bf16 %v61
    %v94 = vunpack.c.l.bf16 %v62
    %v95 = vunpack.c.l.bf16 %v63
    %v96 = vunpack.c.l.bf16 %v64
    %v97 = vunpack.c.l.bf16 %v65
    %v98 = vunpack.c.l.bf16 %v66
    %v99 = vunpack.c.l.bf16 %v67
    %v100 = vunpack.c.l.bf16 %v68
    %v101 = vunpack.c.l.bf16 %v69
    %v102 = vunpack.c.l.bf16 %v70
    %v103 = vunpack.c.l.bf16 %v71
    %v104 = vunpack.c.l.bf16 %v72
    %v105 = vunpack.c.l.bf16 %v73
    %v106 = vunpack.c.l.bf16 %v74
    %v107 = vunpack.c.l.bf16 %v75
    %v108 = vunpack.c.l.bf16 %v76
    %v109 = vunpack.c.l.bf16 %v77
    %v110 = vunpack.c.l.bf16 %v78
    %v111 = vld [vmem:[#allocation5] sm:$0xf]
    %v112 = vld [vmem:[#allocation5 + $0x4] sm:$0xf]
    %v113 = vld [vmem:[#allocation5 + $0x8] sm:$0xf]
    %v114 = vld [vmem:[#allocation5 + $0xc] sm:$0xf]
    %v115 = vunpack.c.l.bf16 %v111
    %v116 = vunpack.c.l.bf16 %v112
    %v117 = vunpack.c.l.bf16 %v113
    %v118 = vunpack.c.l.bf16 %v114
    %v119 = vmul.f32 %v79, %v115
    %v120 = vmul.f32 %v80, %v116
    %v121 = vmul.f32 %v81, %v117
    %v122 = vmul.f32 %v82, %v118
    %v123 = vmul.f32 %v83, %v115
    %v124 = vmul.f32 %v84, %v116
    %v125 = vmul.f32 %v85, %v117
    %v126 = vmul.f32 %v86, %v118
    %v127 = vmul.f32 %v87, %v115
    %v128 = vmul.f32 %v88, %v116
    %v129 = vmul.f32 %v89, %v117
    %v130 = vmul.f32 %v90, %v118
    %v131 = vmul.f32 %v91, %v115
    %v132 = vmul.f32 %v92, %v116
    %v133 = vmul.f32 %v93, %v117
    %v134 = vmul.f32 %v94, %v118
    %v135 = vmul.f32 %v95, %v115
    %v136 = vmul.f32 %v96, %v116
    %v137 = vmul.f32 %v97, %v117
    %v138 = vmul.f32 %v98, %v118
    %v139 = vmul.f32 %v99, %v115
    %v140 = vmul.f32 %v100, %v116
    %v141 = vmul.f32 %v101, %v117
    %v142 = vmul.f32 %v102, %v118
    %v143 = vmul.f32 %v103, %v115
    %v144 = vmul.f32 %v104, %v116
    %v145 = vmul.f32 %v105, %v117
    %v146 = vmul.f32 %v106, %v118
    %v147 = vmul.f32 %v107, %v115
    %v148 = vmul.f32 %v108, %v116
    %v149 = vmul.f32 %v109, %v117
    %v150 = vmul.f32 %v110, %v118
    %151 = vadd.xlane.f32.xlu0 %v119
    %v152 = vpop.xlane.xlu0 %151
    %153 = vadd.xlane.f32.xlu0 %v120
    %v154 = vpop.xlane.xlu0 %153
    %155 = vadd.xlane.f32.xlu0 %v121
    %v156 = vpop.xlane.xlu0 %155
    %157 = vadd.xlane.f32.xlu0 %v122
    %v158 = vpop.xlane.xlu0 %157
    %159 = vadd.xlane.f32.xlu0 %v123
    %v160 = vpop.xlane.xlu0 %159
    %161 = vadd.xlane.f32.xlu0 %v124
    %v162 = vpop.xlane.xlu0 %161
    %163 = vadd.xlane.f32.xlu0 %v125
    %v164 = vpop.xlane.xlu0 %163
    %165 = vadd.xlane.f32.xlu0 %v126
    %v166 = vpop.xlane.xlu0 %165
    %167 = vadd.xlane.f32.xlu0 %v127
    %v168 = vpop.xlane.xlu0 %167
    %169 = vadd.xlane.f32.xlu0 %v128
    %v170 = vpop.xlane.xlu0 %169
    %171 = vadd.xlane.f32.xlu0 %v129
    %v172 = vpop.xlane.xlu0 %171
    %173 = vadd.xlane.f32.xlu0 %v130
    %v174 = vpop.xlane.xlu0 %173
    %175 = vadd.xlane.f32.xlu0 %v131
    %v176 = vpop.xlane.xlu0 %175
    %177 = vadd.xlane.f32.xlu0 %v132
    %v178 = vpop.xlane.xlu0 %177
    %179 = vadd.xlane.f32.xlu0 %v133
    %v180 = vpop.xlane.xlu0 %179
    %181 = vadd.xlane.f32.xlu0 %v134
    %v182 = vpop.xlane.xlu0 %181
    %183 = vadd.xlane.f32.xlu0 %v135
    %v184 = vpop.xlane.xlu0 %183
    %185 = vadd.xlane.f32.xlu0 %v136
    %v186 = vpop.xlane.xlu0 %185
    %187 = vadd.xlane.f32.xlu0 %v137
    %v188 = vpop.xlane.xlu0 %187
    %189 = vadd.xlane.f32.xlu0 %v138
    %v190 = vpop.xlane.xlu0 %189
    %191 = vadd.xlane.f32.xlu0 %v139
    %v192 = vpop.xlane.xlu0 %191
    %193 = vadd.xlane.f32.xlu0 %v140
    %v194 = vpop.xlane.xlu0 %193
    %195 = vadd.xlane.f32.xlu0 %v141
    %v196 = vpop.xlane.xlu0 %195
    %197 = vadd.xlane.f32.xlu0 %v142
    %v198 = vpop.xlane.xlu0 %197
    %199 = vadd.xlane.f32.xlu0 %v143
    %v200 = vpop.xlane.xlu0 %199
    %201 = vadd.xlane.f32.xlu0 %v144
    %v202 = vpop.xlane.xlu0 %201
    %203 = vadd.xlane.f32.xlu0 %v145
    %v204 = vpop.xlane.xlu0 %203
    %205 = vadd.xlane.f32.xlu0 %v146
    %v206 = vpop.xlane.xlu0 %205
    %207 = vadd.xlane.f32.xlu0 %v147
    %v208 = vpop.xlane.xlu0 %207
    %209 = vadd.xlane.f32.xlu0 %v148
    %v210 = vpop.xlane.xlu0 %209
    %211 = vadd.xlane.f32.xlu0 %v149
    %v212 = vpop.xlane.xlu0 %211
    %213 = vadd.xlane.f32.xlu0 %v150
    %v214 = vpop.xlane.xlu0 %213
    %v247 = vlaneseq
    %v248 = vand.u32 %v247, 127
    %v249 = vperm.slane %v152, %v248
    %v250 = vadd.s32 %v248, 4294967288
    %v251 = vperm.slane %v154, %v250
    %vm252 = vcmask 130112
    %v253 = vsel %vm252, %v251, %v249
    %v254 = vadd.s32 %v248, 4294967280
    %v255 = vperm.slane %v156, %v254
    %vm256 = vcmask 195712
    %v257 = vsel %vm256, %v255, %v253
    %v258 = vadd.s32 %v248, 4294967272
    %v259 = vperm.slane %v158, %v258
    %vm260 = vcmask 261312
    %v261 = vsel %vm260, %v259, %v257
    %v262 = vperm.slane %v160, %v248
    %v263 = vperm.slane %v162, %v250
    %v264 = vsel %vm252, %v263, %v262
    %v265 = vperm.slane %v164, %v254
    %v266 = vsel %vm256, %v265, %v264
    %v267 = vperm.slane %v166, %v258
    %v268 = vsel %vm260, %v267, %v266
    %v269 = vperm.slane %v168, %v248
    %v270 = vperm.slane %v170, %v250
    %v271 = vsel %vm252, %v270, %v269
    %v272 = vperm.slane %v172, %v254
    %v273 = vsel %vm256, %v272, %v271
    %v274 = vperm.slane %v174, %v258
    %v275 = vsel %vm260, %v274, %v273
    %v276 = vperm.slane %v176, %v248
    %v277 = vperm.slane %v178, %v250
    %v278 = vsel %vm252, %v277, %v276
    %v279 = vperm.slane %v180, %v254
    %v280 = vsel %vm256, %v279, %v278
    %v281 = vperm.slane %v182, %v258
    %v282 = vsel %vm260, %v281, %v280
    %v283 = vperm.slane %v184, %v248
    %v284 = vperm.slane %v186, %v250
    %v285 = vsel %vm252, %v284, %v283
    %v286 = vperm.slane %v188, %v254
    %v287 = vsel %vm256, %v286, %v285
    %v288 = vperm.slane %v190, %v258
    %v289 = vsel %vm260, %v288, %v287
    %v290 = vperm.slane %v192, %v248
    %v291 = vperm.slane %v194, %v250
    %v292 = vsel %vm252, %v291, %v290
    %v293 = vperm.slane %v196, %v254
    %v294 = vsel %vm256, %v293, %v292
    %v295 = vperm.slane %v198, %v258
    %v296 = vsel %vm260, %v295, %v294
    %v297 = vperm.slane %v200, %v248
    %v298 = vperm.slane %v202, %v250
    %v299 = vsel %vm252, %v298, %v297
    %v300 = vperm.slane %v204, %v254
    %v301 = vsel %vm256, %v300, %v299
    %v302 = vperm.slane %v206, %v258
    %v303 = vsel %vm260, %v302, %v301
    %v304 = vperm.slane %v208, %v248
    %v305 = vperm.slane %v210, %v250
    %v306 = vsel %vm252, %v305, %v304
    %v307 = vperm.slane %v212, %v254
    %v308 = vsel %vm256, %v307, %v306
    %v309 = vperm.slane %v214, %v258
    %v310 = vsel %vm260, %v309, %v308
    %vm311 = vcmask 1041409
    %v312 = vsel %vm311, %v268, %v261
    %vm313 = vcmask 1042434
    %v314 = vsel %vm313, %v275, %v312
    %vm315 = vcmask 1043459
    %v316 = vsel %vm315, %v282, %v314
    %vm317 = vcmask 1044484
    %v318 = vsel %vm317, %v289, %v316
    %vm319 = vcmask 1045509
    %v320 = vsel %vm319, %v296, %v318
    %vm321 = vcmask 1046534
    %v322 = vsel %vm321, %v303, %v320
    %vm323 = vcmask 1047559
    %v324 = vsel %vm323, %v310, %v322
    %vm326 = vcmask 261120
    %v327 = vsel %vm326, %v324, 0.0
    %328 = vadd.xlane.f32.xlu0 %v327
    %v329 = vpop.xlane.xlu0 %328
    %s330 = sld [smem:[#allocation2]]
    %v331 = vstv %s330
    %v332 = vadd.f32 %v329, %v331
    %v333 = vmul.f32 %v332, 0.5
    %v334 = vtanh.pop %v333
    %v335 = vadd.f32 %v334, 1.0
    %v336 = vmul.f32 %v335, 0.5
    %vm337 = vcmask 7168
    %338 = vst.msk [vmem:[%s3] sm:$0xff] %vm337, %v336
    // Predicated region
    $region22: #{tpu_custom_call.1} parent=1 // pred_check
      _
    $region23: #{tpu_custom_call.1} parent=1 // pred_check_branch
      %340 = sbr.rel (0) target = $region25
    $region24: #{tpu_custom_call.1} parent=1 // pred_region
      _
    $region25: #{tpu_custom_call.1} parent=1 // pred_fallthru
      _
    // Predicated region
    $region26: #{tpu_custom_call.1} parent=1 // pred_check
      _
    $region27: #{tpu_custom_call.1} parent=1 // pred_check_branch
      %342 = sbr.rel (0) target = $region29
    $region28: #{tpu_custom_call.1} parent=1 // pred_region
      _
    $region29: #{tpu_custom_call.1} parent=1 // pred_fallthru
      _
    %343 = vsyncpa [#allocation4], 1
    %344 = vsyncpa [#allocation6], 1

</llo_original>
